<compile_context>
chip_gen: v5e
topology: v5e:2x2
jax: 0.10.0
libtpu: 0.0.40
codegen_flags: <defaults>
</compile_context>

<pallas_src>
import functools
import math

import jax
import jax.numpy as jnp
from jax.experimental import pallas as pl
from jax.experimental.pallas import tpu as pltpu


def _round_up(x, m):
    return ((x + m - 1) // m) * m


def _linear_kernel_single_k(x_ref, w_ref, b_ref, o_ref):
    # Whole reduction in one block: skip the accumulator scratch and the
    # init/finalize branches entirely.
    acc = jnp.dot(x_ref[...], w_ref[...], preferred_element_type=jnp.float32)
    o_ref[...] = (acc + b_ref[...].astype(jnp.float32)).astype(o_ref.dtype)


def _linear_kernel_multi_k(x_ref, w_ref, b_ref, o_ref, acc_ref):
    # x_ref: (TM, TK)   w_ref: (TK, TN)   b_ref: (1, TN)
    # o_ref: (TM, TN)   acc_ref: (TM, TN) f32 scratch, resident across K steps
    k = pl.program_id(2)

    @pl.when(k == 0)
    def _init():
        acc_ref[...] = jnp.zeros_like(acc_ref)

    acc_ref[...] += jnp.dot(
        x_ref[...], w_ref[...], preferred_element_type=jnp.float32
    )

    @pl.when(k == pl.num_programs(2) - 1)
    def _finalize():
        # Bias add + downcast once, fused with the writeback.
        o_ref[...] = (acc_ref[...] + b_ref[...].astype(jnp.float32)).astype(
            o_ref.dtype
        )


@functools.partial(jax.jit, static_argnames=("compute_dtype",))
def linear_norm(x, weight, bias, *, compute_dtype=None):
    """y = x @ weight.T + bias over the last axis of x (PyTorch Linear).

    compute_dtype: dtype the MXU operands are cast to (e.g. jnp.bfloat16 on
    v6e/v7x).  Accumulation and the bias add are always f32; the output keeps
    x.dtype.  Default (None) keeps the input dtype -> exact f32 semantics.
    """
    orig_shape = x.shape
    K = orig_shape[-1]          # in_dim
    N = weight.shape[0]         # out_dim
    out_dtype = x.dtype

    x2d = x.reshape(-1, K)      # (M, K)
    M = x2d.shape[0]

    if compute_dtype is None:
        compute_dtype = x.dtype

    # One-time transpose (K, N), lane-dense for the MXU.  Under jit the
    # transpose/cast/pad fuse instead of being separate HBM round-trips.
    x2d = x2d.astype(compute_dtype)
    w_t = weight.T.astype(compute_dtype)

    # ---- Tile selection --------------------------------------------------
    TM_MAX, TN_MAX, TK_MAX = 512, 512, 1024
    TM = min(TM_MAX, _round_up(M, 8))
    TN = min(TN_MAX, _round_up(N, 128))      # lane-dense output stores
    if K <= TK_MAX:
        # Full-extent K block: no padding needed even if K % 128 != 0.
        TK = K
        K_pad = K
    else:
        TK = TK_MAX
        K_pad = _round_up(K, TK)

    M_pad = _round_up(M, TM)
    N_pad = _round_up(N, TN)

    # If both parallel axes have a single block, split M so megacore chips
    # (v7x: 2 TensorCores) can shard the grid; negligible cost elsewhere.
    if M_pad // TM == 1 and N_pad // TN == 1 and TM >= 16:
        TM = _round_up(TM // 2, 8)
        M_pad = _round_up(M, TM)

    # ---- Zero padding (keeps the matmul exact) ---------------------------
    if M_pad != M or K_pad != K:
        x_p = jnp.pad(x2d, ((0, M_pad - M), (0, K_pad - K)))
    else:
        x_p = x2d
    if K_pad != K or N_pad != N:
        w_p = jnp.pad(w_t, ((0, K_pad - K), (0, N_pad - N)))
    else:
        w_p = w_t
    b_p = bias.reshape(1, N)
    if N_pad != N:
        b_p = jnp.pad(b_p, ((0, 0), (0, N_pad - N)))

    i_blocks = M_pad // TM
    j_blocks = N_pad // TN
    kt = K_pad // TK
    grid = (i_blocks, j_blocks, kt)

    # ---- VMEM budget / cost estimate (per-operand itemsizes) -------------
    in_isz = jnp.dtype(compute_dtype).itemsize
    b_isz = jnp.dtype(b_p.dtype).itemsize
    out_isz = jnp.dtype(out_dtype).itemsize
    vmem_bytes = (
        2 * (TM * TK * in_isz + TK * TN * in_isz + TN * b_isz + TM * TN * out_isz)
        + (TM * TN * 4 if kt > 1 else 0)   # f32 accumulator scratch
        + (2 << 20)                        # headroom
    )
    # Stay well inside v7x's 64 MiB/TC (also above v5e's 16 MiB default limit).
    vmem_bytes = min(int(vmem_bytes), 56 << 20)

    flops = 2 * M_pad * N_pad * K_pad
    bytes_accessed = (
        x_p.size * in_isz * j_blocks       # x is re-streamed per j block
        + w_p.size * in_isz * i_blocks     # w is re-streamed per i block
        + b_p.size * b_isz * i_blocks
        + M_pad * N_pad * out_isz
    )

    if kt == 1:
        kernel = _linear_kernel_single_k
        scratch_shapes = ()
    else:
        kernel = _linear_kernel_multi_k
        scratch_shapes = (pltpu.VMEM((TM, TN), jnp.float32),)

    out = pl.pallas_call(
        kernel,
        out_shape=jax.ShapeDtypeStruct((M_pad, N_pad), out_dtype),
        grid_spec=pltpu.PrefetchScalarGridSpec(
            num_scalar_prefetch=0,
            grid=grid,
            in_specs=[
                pl.BlockSpec((TM, TK), lambda i, j, k: (i, k)),
                pl.BlockSpec((TK, TN), lambda i, j, k: (k, j)),
                pl.BlockSpec((1, TN), lambda i, j, k: (0, j)),
            ],
            out_specs=pl.BlockSpec((TM, TN), lambda i, j, k: (i, j)),
            scratch_shapes=scratch_shapes,
        ),
        compiler_params=pltpu.CompilerParams(
            dimension_semantics=("parallel", "parallel", "arbitrary"),
            vmem_limit_bytes=int(vmem_bytes),
        ),
        cost_estimate=pl.CostEstimate(
            flops=int(flops),
            transcendentals=0,
            bytes_accessed=int(bytes_accessed),
        ),
    )(x_p, w_p, b_p)

    out = out[:M, :N]
    return out.reshape(*orig_shape[:-1], N)


def init_linear_norm_params(key, in_dim, out_dim, w_init_gain="linear"):
    """Deterministic xavier_uniform init, matching the PyTorch module."""
    gain = 1.0  # calculate_gain('linear') == 1.0
    limit = gain * math.sqrt(6.0 / (in_dim + out_dim))
    wkey, _ = jax.random.split(key)
    weight = jax.random.uniform(
        wkey, (out_dim, in_dim), minval=-limit, maxval=limit, dtype=jnp.float32
    )
    # torch.nn.Linear default bias init (uniform(-1/sqrt(fan_in), ...)); the
    # module never re-initializes bias, so reproduce that default here.
    bkey = jax.random.fold_in(key, 1)
    bbound = 1.0 / math.sqrt(in_dim)
    bias = jax.random.uniform(
        bkey, (out_dim,), minval=-bbound, maxval=bbound, dtype=jnp.float32
    )
    return weight, bias


if __name__ == "__main__":
    key = jax.random.PRNGKey(0)
    batch, seq, in_dim, out_dim = 2, 8, 32, 16

    xkey, pkey = jax.random.split(key)
    x = jax.random.normal(xkey, (batch, seq, in_dim), dtype=jnp.float32)
    weight, bias = init_linear_norm_params(pkey, in_dim, out_dim)

    y_ref = x @ weight.T + bias

    # Exact-semantics f32 path.
    y = linear_norm(x, weight, bias)
    jax.block_until_ready(y)
    assert y.shape == (batch, seq, out_dim)
    assert jnp.allclose(y, y_ref, atol=1e-5, rtol=1e-5)

    # bf16-MXU path (recommended on v6e/v7x): bf16 operand tiles, f32
    # accumulation + bias, f32 output -> looser tolerance.
    y_bf16 = linear_norm(x, weight, bias, compute_dtype=jnp.bfloat16)
    jax.block_until_ready(y_bf16)
    assert jnp.allclose(y_bf16, y_ref, atol=5e-2, rtol=5e-2)

    print("KERNEL_OK")
</pallas_src>

<mosaic_0001>
module attributes {stable_mosaic.version = 11 : i64} {
  func.func @_linear_kernel_single_k(%arg0: i32, %arg1: i32, %arg2: i32, %arg3: memref<8x32xf32, #tpu.memory_space<vmem>>, %arg4: memref<32x128xf32, #tpu.memory_space<vmem>>, %arg5: memref<1x128xf32, #tpu.memory_space<vmem>>, %arg6: memref<8x128xf32, #tpu.memory_space<vmem>>) attributes {dimension_semantics = [#tpu.dimension_semantics<parallel>, #tpu.dimension_semantics<parallel>, #tpu.dimension_semantics<arbitrary>], iteration_bounds = array<i64: 2, 1, 1>, scalar_prefetch = 0 : i64, scratch_operands = 0 : i64, tpu.core_type = #tpu.core_type<tc>, window_params = [{transform_indices = @transform_0, window_bounds = array<i64: 8, 32>}, {transform_indices = @transform_1, window_bounds = array<i64: 32, 128>}, {transform_indices = @transform_2, window_bounds = array<i64: 1, 128>}, {transform_indices = @transform_3, window_bounds = array<i64: 8, 128>}]} {
    %c0 = arith.constant 0 : index
    %c0_0 = arith.constant 0 : index
    %0 = vector.load %arg3[%c0, %c0_0] : memref<8x32xf32, #tpu.memory_space<vmem>>, vector<8x32xf32>
    %c0_1 = arith.constant 0 : index
    %c0_2 = arith.constant 0 : index
    %1 = vector.load %arg4[%c0_1, %c0_2] : memref<32x128xf32, #tpu.memory_space<vmem>>, vector<32x128xf32>
    %cst = arith.constant dense<0.000000e+00> : vector<8x128xf32>
    %2 = tpu.matmul %0, %1, %cst {dimension_numbers = #tpu.dot_dimension_numbers<[1], [0], [0], [1], [0, 0, 1, 1], [], []>} : vector<8x32xf32>, vector<32x128xf32>, vector<8x128xf32> -> vector<8x128xf32>
    %c0_3 = arith.constant 0 : index
    %c0_4 = arith.constant 0 : index
    %3 = vector.load %arg5[%c0_3, %c0_4] : memref<1x128xf32, #tpu.memory_space<vmem>>, vector<1x128xf32>
    %4 = vector.broadcast %3 : vector<1x128xf32> to vector<8x128xf32>
    %5 = arith.addf %2, %4 : vector<8x128xf32>
    %c0_5 = arith.constant 0 : index
    %c0_6 = arith.constant 0 : index
    %6 = vector.load %arg6[%c0_5, %c0_6] : memref<8x128xf32, #tpu.memory_space<vmem>>, vector<8x128xf32>
    tpu.vector_store %arg6[%c0_5, %c0_6], %5 {strides = array<i32>} : memref<8x128xf32, #tpu.memory_space<vmem>>, vector<8x128xf32>,
    return
  }
  func.func @transform_0(%arg0: i32, %arg1: i32, %arg2: i32) -> (i32, i32) {
    %c0_i32 = arith.constant 0 : i32
    return %arg0, %arg2 : i32, i32
  }
  func.func @transform_1(%arg0: i32, %arg1: i32, %arg2: i32) -> (i32, i32) {
    %c0_i32 = arith.constant 0 : i32
    return %arg2, %arg1 : i32, i32
  }
  func.func @transform_2(%arg0: i32, %arg1: i32, %arg2: i32) -> (i32, i32) {
    %c0_i32 = arith.constant 0 : i32
    %c0_i32_0 = arith.constant 0 : i32
    return %c0_i32, %arg1 : i32, i32
  }
  func.func @transform_3(%arg0: i32, %arg1: i32, %arg2: i32) -> (i32, i32) {
    %c0_i32 = arith.constant 0 : i32
    return %arg0, %arg1 : i32, i32
  }
}

</mosaic_0001>

<llo_original>
// kernel: linear_norm.1
$region0: #{linear_norm.1}
  #allocation0 [shape = 'u32[]', space=smem, size = 0x4, offset = 0x4, fixed_abs, tag = 'smem constant byte address 0x4 - core index']
  #allocation1 [shape = 'u32[72,128]{1,0:T(1,128)}', space=vmem, size = 0x9000, scoped, tag = 'internal scratch']
  %s0 = inlined_call_operand.vmem [shape: f32[16,32], index: 0, kind: input, shape index: {}]
  %s1 = inlined_call_operand.vmem [shape: f32[32,128], index: 1, kind: input, shape index: {}]
  %s2 = inlined_call_operand.vmem [shape: f32[1,128], index: 2, kind: input, shape index: {}]
  %s3 = inlined_call_operand.vmem [shape: f32[16,128], index: 3, kind: output, shape index: {}]
  %s4 = sld [smem:[#allocation0]]
  $region45: #{linear_norm.1} parent=0
    _
  %s6 = ssub.s32 1, %s4
  %s7 = scalar_select 0, %s6, %s4
  loop: start=0, step=1, limit=4
  $region2: #{linear_norm.1} parent=0 // loop_pre_header
    _
  $region3: #{linear_norm.1} parent=0 // loop_header
    %s9 = sphi 0, %s13
    %p10 = scmp.ge.s32.totalorder %s9, 4
    %s16 = sphi 0, %s35
    %s17 = sphi 0, %s31
    %s18 = sphi 0, %s27
    %s19 = sphi 0, %s16
    %s20 = sphi 0, %s17
    %s21 = sphi 0, %s18
    %s22 = sphi 0, %s19
    %s23 = sphi 0, %s20
    %s24 = sphi 0, %s21
    %s40 = sphi 0, %s42
    %s43 = sphi 0, %s40
    %s44 = sphi 0, %s43
    %s60 = sphi 0, %s44
    %s68 = sphi 0, %s70
    %s71 = sphi 0, %s68
    %s72 = sphi 0, %s71
    %s88 = sphi 0, %s72
    %s94 = sphi 0, %s96
    %s97 = sphi 0, %s94
    %s98 = sphi 0, %s97
    %s114 = sphi 0, %s98
    %s122 = sphi 0, %s124
    %s125 = sphi 0, %s122
    %s126 = sphi 0, %s125
    %s142 = sphi 0, %s126
  $region4: #{linear_norm.1} parent=0 // loop_header_branch
    %12 = sbr.rel (%p10) target = $region8
  $region5: #{linear_norm.1} parent=0 // loop_body
    %s14 = ssub.s32 %s9, 1
    %s15 = ssub.s32 %s9, 2
    %s25 = sadd.s32 1, %s18
    %p26 = scmp.ge.s32.totalorder %s25, 1
    %s27 = scalar_select %p26, 0, %s25
    %s28 = sadd.s32 1, %s17
    %s29 = scalar_select %p26, %s28, %s17
    %p30 = scmp.ge.s32.totalorder %s29, 1
    %s31 = scalar_select %p30, 0, %s29
    %s32 = sadd.s32 1, %s16
    %s33 = scalar_select %p30, %s32, %s16
    %p34 = scmp.ge.s32.totalorder %s33, 2
    %s35 = scalar_select %p34, 0, %s33
    %s36 = ssub.s32 %s16, %s35
    %s37 = ssub.s32 %s18, %s27
    %s38 = sor.u32 %s36, %s37
    %p39 = scmp.eq.s32.totalorder %s38, 0
    %s41 = sadd.s32 %s40, 1
    %s42 = scalar_select %p39, %s40, %s41
    %p45 = pneg %p39
    %p46 = scmp.eq.s32.totalorder %s9, 1
    %p47 = por %p45, %p46
    %p48 = scmp.ne.s32.totalorder %s40, %s43
    %p49 = scmp.eq.s32.totalorder %s9, 0
    %p50 = por %p48, %p49
    %p51 = scmp.ne.s32.totalorder %s40, %s43
    %p52 = scmp.eq.s32.totalorder %s14, 1
    %p53 = por %p51, %p52
    %p54 = scmp.ne.s32.totalorder %s43, %s44
    %p55 = scmp.eq.s32.totalorder %s14, 0
    %p56 = por %p54, %p55
    %p57 = scmp.ne.s32.totalorder %s43, %s44
    %p58 = scmp.eq.s32.totalorder %s15, 1
    %p59 = por %p57, %p58
    %p61 = scmp.ne.s32.totalorder %s44, %s60
    %p62 = scmp.eq.s32.totalorder %s15, 0
    %p63 = por %p61, %p62
    %s64 = ssub.s32 %s18, %s27
    %s65 = ssub.s32 %s17, %s31
    %s66 = sor.u32 %s64, %s65
    %p67 = scmp.eq.s32.totalorder %s66, 0
    %s69 = sadd.s32 %s68, 1
    %s70 = scalar_select %p67, %s68, %s69
    %p73 = pneg %p67
    %p74 = scmp.eq.s32.totalorder %s9, 1
    %p75 = por %p73, %p74
    %p76 = scmp.ne.s32.totalorder %s68, %s71
    %p77 = scmp.eq.s32.totalorder %s9, 0
    %p78 = por %p76, %p77
    %p79 = scmp.ne.s32.totalorder %s68, %s71
    %p80 = scmp.eq.s32.totalorder %s14, 1
    %p81 = por %p79, %p80
    %p82 = scmp.ne.s32.totalorder %s71, %s72
    %p83 = scmp.eq.s32.totalorder %s14, 0
    %p84 = por %p82, %p83
    %p85 = scmp.ne.s32.totalorder %s71, %s72
    %p86 = scmp.eq.s32.totalorder %s15, 1
    %p87 = por %p85, %p86
    %p89 = scmp.ne.s32.totalorder %s72, %s88
    %p90 = scmp.eq.s32.totalorder %s15, 0
    %p91 = por %p89, %p90
    %s92 = ssub.s32 %s17, %s31
    %p93 = scmp.eq.s32.totalorder %s92, 0
    %s95 = sadd.s32 %s94, 1
    %s96 = scalar_select %p93, %s94, %s95
    %p99 = pneg %p93
    %p100 = scmp.eq.s32.totalorder %s9, 1
    %p101 = por %p99, %p100
    %p102 = scmp.ne.s32.totalorder %s94, %s97
    %p103 = scmp.eq.s32.totalorder %s9, 0
    %p104 = por %p102, %p103
    %p105 = scmp.ne.s32.totalorder %s94, %s97
    %p106 = scmp.eq.s32.totalorder %s14, 1
    %p107 = por %p105, %p106
    %p108 = scmp.ne.s32.totalorder %s97, %s98
    %p109 = scmp.eq.s32.totalorder %s14, 0
    %p110 = por %p108, %p109
    %p111 = scmp.ne.s32.totalorder %s97, %s98
    %p112 = scmp.eq.s32.totalorder %s15, 1
    %p113 = por %p111, %p112
    %p115 = scmp.ne.s32.totalorder %s98, %s114
    %p116 = scmp.eq.s32.totalorder %s15, 0
    %p117 = por %p115, %p116
    %s118 = ssub.s32 %s16, %s35
    %s119 = ssub.s32 %s17, %s31
    %s120 = sor.u32 %s118, %s119
    %p121 = scmp.eq.s32.totalorder %s120, 0
    %s123 = sadd.s32 %s122, 1
    %s124 = scalar_select %p121, %s122, %s123
    %p127 = pneg %p121
    %p128 = scmp.eq.s32.totalorder %s9, 1
    %p129 = por %p127, %p128
    %p130 = scmp.ne.s32.totalorder %s122, %s125
    %p131 = scmp.eq.s32.totalorder %s9, 0
    %p132 = por %p130, %p131
    %p133 = scmp.ne.s32.totalorder %s122, %s125
    %p134 = scmp.eq.s32.totalorder %s14, 1
    %p135 = por %p133, %p134
    %p136 = scmp.ne.s32.totalorder %s125, %s126
    %p137 = scmp.eq.s32.totalorder %s14, 0
    %p138 = por %p136, %p137
    %p139 = scmp.ne.s32.totalorder %s125, %s126
    %p140 = scmp.eq.s32.totalorder %s15, 1
    %p141 = por %p139, %p140
    %p143 = scmp.ne.s32.totalorder %s126, %s142
    %p144 = scmp.eq.s32.totalorder %s15, 0
    %p145 = por %p143, %p144
    %p146 = scmp.le.s32.totalorder 1, %s9
    %p147 = scmp.lt.s32.totalorder %s9, 3
    %p148 = pnand %p146, %p147
    %p149 = pneg %p148
    // Predicated region
    $region9: #{linear_norm.1} parent=5 // pred_check
      _
    $region10: #{linear_norm.1} parent=5 // pred_check_branch
      %151 = sbr.rel (%p148) target = $region12
    $region11: #{linear_norm.1} parent=5 // pred_region
      %s152 = ssub.s32 %s9, 1
      // Predicated region
      $region13: #{linear_norm.1} parent=11 // pred_check
        %p153 = pneg %p84
      $region14: #{linear_norm.1} parent=11 // pred_check_branch
        %155 = sbr.rel (%p153) target = $region16
      $region15: #{linear_norm.1} parent=11 // pred_region
        %s156 = smul.u32 4, %s21
        %p157 = scmp.lt.s32.totalorder %s156, 3
        %s158 = scalar_select %p157, %s156, 3
        %p159 = scmp.lt.s32.totalorder %s20, 0
        %s160 = scalar_select %p159, %s20, 0
        %s161 = sadd.s32 %s160, %s158
        %s162 = smul.addr %s161, 8
        %s163 = scalar_lea.vmem %s1, %s162
        %s164 = smul.u32 4, %s21
      $region16: #{linear_norm.1} parent=11 // pred_fallthru
        _
      // Predicated region
      $region17: #{linear_norm.1} parent=11 // pred_check
        %p165 = pneg %p110
      $region18: #{linear_norm.1} parent=11 // pred_check_branch
        %167 = sbr.rel (%p165) target = $region20
      $region19: #{linear_norm.1} parent=11 // pred_region
        %p168 = scmp.lt.s32.totalorder %s20, 0
        %s169 = scalar_select %p168, %s20, 0
        %s170 = scalar_lea.vmem %s2, %s169
      $region20: #{linear_norm.1} parent=11 // pred_fallthru
        _
    $region12: #{linear_norm.1} parent=5 // pred_fallthru
      _
    %p171 = scmp.lt.s32.totalorder %s9, 2
    // Predicated region
    $region21: #{linear_norm.1} parent=5 // pred_check
      %p172 = pneg %p171
    $region22: #{linear_norm.1} parent=5 // pred_check_branch
      %174 = sbr.rel (%p172) target = $region24
    $region23: #{linear_norm.1} parent=5 // pred_region
      // Predicated region
      $region25: #{linear_norm.1} parent=23 // pred_check
        %p175 = pneg %p50
      $region26: #{linear_norm.1} parent=23 // pred_check_branch
        %177 = sbr.rel (%p175) target = $region28
      $region27: #{linear_norm.1} parent=23 // pred_region
        %p178 = scmp.lt.s32.totalorder %s16, 1
        %s179 = scalar_select %p178, %s16, 1
        %p180 = scmp.lt.s32.totalorder %s18, 0
        %s181 = scalar_select %p180, %s18, 0
        %s182 = sadd.s32 %s181, %s179
        %s183 = smul.addr %s182, 8
        %s184 = scalar_lea.vmem %s0, %s183
      $region28: #{linear_norm.1} parent=23 // pred_fallthru
        _
    $region24: #{linear_norm.1} parent=5 // pred_fallthru
      _
    %p185 = scmp.le.s32.totalorder 1, %s9
    %p186 = scmp.lt.s32.totalorder %s9, 3
    %p187 = pnand %p185, %p186
    %p188 = pneg %p187
    // Predicated region
    $region29: #{linear_norm.1} parent=5 // pred_check
      _
    $region30: #{linear_norm.1} parent=5 // pred_check_branch
      %190 = sbr.rel (%p187) target = $region32
    $region31: #{linear_norm.1} parent=5 // pred_region
      %s191 = ssub.s32 %s9, 1
      %p192 = scmp.lt.s32.totalorder %s19, 1
      %s193 = scalar_select %p192, %s19, 1
      %p194 = scmp.lt.s32.totalorder %s21, 0
      %s195 = scalar_select %p194, %s21, 0
      %s196 = sadd.s32 %s195, %s193
      %s197 = smul.addr %s196, 8
      %s198 = scalar_lea.vmem %s0, %s197
      %p199 = pneg %p56
      %p200 = pneg %p53
      %s201 = smul.u32 4, %s21
      %p202 = scmp.lt.s32.totalorder %s201, 3
      %s203 = scalar_select %p202, %s201, 3
      %p204 = scmp.lt.s32.totalorder %s20, 0
      %s205 = scalar_select %p204, %s20, 0
      %s206 = sadd.s32 %s205, %s203
      %s207 = smul.addr %s206, 8
      %s208 = scalar_lea.vmem %s1, %s207
      %p209 = pneg %p84
      %p210 = pneg %p81
      %p211 = scmp.lt.s32.totalorder %s20, 0
      %s212 = scalar_select %p211, %s20, 0
      %s213 = scalar_lea.vmem %s2, %s212
      %p214 = pneg %p110
      %p215 = pneg %p107
      %p216 = pneg %p138
      %p217 = pneg %p135
      %p218 = scmp.lt.s32.totalorder %s19, 1
      %s219 = scalar_select %p218, %s19, 1
      %p220 = scmp.lt.s32.totalorder %s20, 0
      %s221 = scalar_select %p220, %s20, 0
      %s222 = sadd.s32 %s221, %s219
      %s223 = smul.addr %s222, 8
      %s224 = scalar_lea.vmem %s3, %s223
      %p225 = scmp.lt.s32.totalorder %s19, 1
      %s226 = scalar_select %p225, %s19, 1
      %p227 = scmp.lt.s32.totalorder %s21, 0
      %s228 = scalar_select %p227, %s21, 0
      %s229 = sadd.s32 %s228, %s226
      %s230 = smul.addr %s229, 8
      %s231 = scalar_lea.vmem %s0, %s230
      %s232 = smul.u32 4, %s21
      %p233 = scmp.lt.s32.totalorder %s232, 3
      %s234 = scalar_select %p233, %s232, 3
      %p235 = scmp.lt.s32.totalorder %s20, 0
      %s236 = scalar_select %p235, %s20, 0
      %s237 = sadd.s32 %s236, %s234
      %s238 = smul.addr %s237, 8
      %s239 = scalar_lea.vmem %s1, %s238
      %s240 = smul.u32 4, %s21
      %p241 = scmp.lt.s32.totalorder %s20, 0
      %s242 = scalar_select %p241, %s20, 0
      %s243 = scalar_lea.vmem %s2, %s242
      %p244 = scmp.lt.s32.totalorder %s19, 1
      %s245 = scalar_select %p244, %s19, 1
      %p246 = scmp.lt.s32.totalorder %s20, 0
      %s247 = scalar_select %p246, %s20, 0
      %s248 = sadd.s32 %s247, %s245
      %s249 = smul.addr %s248, 8
      %s250 = scalar_lea.vmem %s3, %s249
      %v251 = vld [vmem:[%s231] sm:$0xff]
      %v252 = vld [vmem:[%s239] sm:$0xff]
      %v253 = vld [vmem:[%s239 + $0x8] sm:$0xff]
      %v254 = vld [vmem:[%s239 + $0x10] sm:$0xff]
      %v255 = vld [vmem:[%s239 + $0x18] sm:$0xff]
      %v256 = vld [vmem:[%s243] sm:$0x1]
      %v258 = vperm.slane %v256, 0
      %vm260 = vcmask 261120
      %v262 = vsel %vm260, %v251, 0
      %264 = vmatpush.msra.mxu0 0.0
      %265 = vmatpush.msra.mxu0 0.0
      %266 = vmatpush.msra.mxu0 0.0
      %267 = vmatpush.msra.mxu0 0.0
      %268 = vmatpush.msra.mxu0 0.0
      %269 = vmatpush.msra.mxu0 0.0
      %270 = vmatpush.msra.mxu0 0.0
      %271 = vmatpush.msra.mxu0 0.0
      %272 = vmatpush.msra.mxu0 0.0
      %273 = vmatpush.msra.mxu0 0.0
      %274 = vmatpush.msra.mxu0 0.0
      %275 = vmatpush.msra.mxu0 0.0
      %276 = vmatpush.msra.mxu0 %v255
      %277 = vmatpush.msra.mxu0 %v254
      %278 = vmatpush.msra.mxu0 %v253
      %279 = vmatpush.msra.mxu0 %v252
      %280 = vmatmul.f32.gmra.mxu0 %v262
      %v281 = vpop.f32.mrf.mxu0
      %v282 = vadd.f32 %v258, %v281
      %283 = vdwg.mxu0
      %284 = vst [vmem:[%s250] sm:$0xff] %v282
      %p285 = scmp.lt.s32.totalorder %s19, 1
      %s286 = scalar_select %p285, %s19, 1
      %p287 = scmp.lt.s32.totalorder %s20, 0
      %s288 = scalar_select %p287, %s20, 0
      %s289 = sadd.s32 %s288, %s286
      %s290 = smul.addr %s289, 8
      %s291 = scalar_lea.vmem %s3, %s290
      // Predicated region
      $region33: #{linear_norm.1} parent=31 // pred_check
        %p292 = pneg %p135
      $region34: #{linear_norm.1} parent=31 // pred_check_branch
        %294 = sbr.rel (%p292) target = $region36
      $region35: #{linear_norm.1} parent=31 // pred_region
        _
      $region36: #{linear_norm.1} parent=31 // pred_fallthru
        _
    $region32: #{linear_norm.1} parent=5 // pred_fallthru
      _
    %p295 = scmp.le.s32.totalorder 2, %s9
    // Predicated region
    $region37: #{linear_norm.1} parent=5 // pred_check
      %p296 = pneg %p295
    $region38: #{linear_norm.1} parent=5 // pred_check_branch
      %298 = sbr.rel (%p296) target = $region40
    $region39: #{linear_norm.1} parent=5 // pred_region
      %s299 = ssub.s32 %s9, 2
      // Predicated region
      $region41: #{linear_norm.1} parent=39 // pred_check
        %p300 = pneg %p141
      $region42: #{linear_norm.1} parent=39 // pred_check_branch
        %302 = sbr.rel (%p300) target = $region44
      $region43: #{linear_norm.1} parent=39 // pred_region
        %p303 = scmp.lt.s32.totalorder %s22, 1
        %s304 = scalar_select %p303, %s22, 1
        %p305 = scmp.lt.s32.totalorder %s23, 0
        %s306 = scalar_select %p305, %s23, 0
        %s307 = sadd.s32 %s306, %s304
        %s308 = smul.addr %s307, 8
        %s309 = scalar_lea.vmem %s3, %s308
      $region44: #{linear_norm.1} parent=39 // pred_fallthru
        _
    $region40: #{linear_norm.1} parent=5 // pred_fallthru
      _
  $region6: #{linear_norm.1} parent=0 // loop_footer
    %s13 = sadd.s32 1, %s9
  $region7: #{linear_norm.1} parent=0 // loop_footer_branch
    %8 = sbr.rel target = $region3
  $region8: #{linear_norm.1} parent=0 // loop_exit
    _

</llo_original>
